<compile_context>
chip_gen: v6e
topology: v6e:2x2x1
jax: 0.10.0
libtpu: 0.0.40
codegen_flags: <defaults>
</compile_context>

<pallas_src>
import functools
import math

import jax
import jax.numpy as jnp
from jax.experimental import pallas as pl
from jax.experimental.pallas import tpu as pltpu


_LANE = 128            # lane width: last-dim alignment for lane-dense stores
_BATCH_TILE = 128      # rows per grid block on the batch-parallel path
_GRID_MIN_BATCH = 256  # below this, a grid is pure per-step overhead


def _mlp_kernel(*refs, n_layers):
    """Fused MLP body. refs = (x, w0, b0, ..., w_{n-1}, b_{n-1}, out).

    x / W are bf16 (MXU-native); each dot accumulates in f32; bias add + ReLU
    run in f32; hidden activations are re-cast to bf16 so every dot feeds the
    bf16 MXU path. Intermediates never touch HBM.
    """
    x_ref = refs[0]
    o_ref = refs[-1]
    wb = refs[1:-1]

    x = x_ref[...]                           # (TB, D_in) bf16
    for i in range(n_layers):
        w = wb[2 * i][...]                   # (D_i, D_{i+1}) bf16
        b = wb[2 * i + 1][...]               # (1, D_{i+1})   f32
        y = jnp.dot(x, w, preferred_element_type=jnp.float32) + b
        if i < n_layers - 1:
            y = jnp.maximum(y, 0.0)          # ReLU on hidden layers only
            x = y.astype(jnp.bfloat16)       # next dot in bf16
        else:
            x = y                            # final layer stays f32
    o_ref[...] = x.astype(o_ref.dtype)


def torch_nn_model_forward(x, params):
    """Pallas implementation of torch_nn_model.forward (single fused kernel)."""
    B, D_in = x.shape
    n_layers = len(params)
    D_out = params[-1][0].shape[1]
    D_out_pad = math.ceil(D_out / _LANE) * _LANE

    # ---- pre-pack inputs (bf16 weights/activations, f32 biases) -----------
    x_bf16 = x.astype(jnp.bfloat16)
    packed = []
    for li, (w, b) in enumerate(params):
        w = w.astype(jnp.bfloat16)
        b = b.astype(jnp.float32).reshape(1, -1)
        if li == n_layers - 1 and D_out_pad != D_out:
            # Pad last layer to a lane-dense (multiple-of-128) output width so
            # the final store is an unmasked vst; sliced back outside.
            w = jnp.pad(w, ((0, 0), (0, D_out_pad - D_out)))
            b = jnp.pad(b, ((0, 0), (0, D_out_pad - D_out)))
        packed.append((w, b))

    flat_wb = []
    for w, b in packed:
        flat_wb.append(w)
        flat_wb.append(b)

    kernel = functools.partial(_mlp_kernel, n_layers=n_layers)
    vmem = pltpu.MemorySpace.VMEM

    # ---- VMEM budget -------------------------------------------------------
    resident_bytes = (
        x_bf16.size * 2
        + sum(w.size * 2 + b.size * 4 for w, b in packed)
        + B * D_out_pad * 4
    )
    vmem_limit = None
    if resident_bytes > 12 * 1024 * 1024:
        # Raise the scoped-VMEM limit (v5e default 16 MiB, v6e/v7x 32 MiB);
        # cap at v7x's 64 MiB physical VMEM.
        vmem_limit = min(2 * resident_bytes + (4 << 20), 64 << 20)

    if B >= _GRID_MIN_BATCH:
        # ---- batch-parallel grid path (128-row tiles, shards across TCs) ---
        TB = _BATCH_TILE
        n_blocks = pl.cdiv(B, TB)
        B_pad = n_blocks * TB
        if B_pad != B:
            x_bf16 = jnp.pad(x_bf16, ((0, B_pad - B), (0, 0)))

        in_specs = [pl.BlockSpec((TB, D_in), lambda i: (i, 0))]
        for w, b in packed:
            in_specs.append(pl.BlockSpec(w.shape, lambda i: (0, 0)))
            in_specs.append(pl.BlockSpec(b.shape, lambda i: (0, 0)))
        out_specs = pl.BlockSpec((TB, D_out_pad), lambda i: (i, 0))

        out = pl.pallas_call(
            kernel,
            out_shape=jax.ShapeDtypeStruct((B_pad, D_out_pad), jnp.float32),
            grid=(n_blocks,),
            in_specs=in_specs,
            out_specs=out_specs,
            compiler_params=pltpu.CompilerParams(
                dimension_semantics=("parallel",),
                vmem_limit_bytes=vmem_limit,
            ),
        )(x_bf16, *flat_wb)
    else:
        # ---- tiny-batch path: one full-block invocation, no grid -----------
        out = pl.pallas_call(
            kernel,
            out_shape=jax.ShapeDtypeStruct((B, D_out_pad), jnp.float32),
            in_specs=[pl.BlockSpec(memory_space=vmem)
                      for _ in range(1 + 2 * n_layers)],
            out_specs=pl.BlockSpec(memory_space=vmem),
            compiler_params=pltpu.CompilerParams(vmem_limit_bytes=vmem_limit),
        )(x_bf16, *flat_wb)

    return out[:B, :D_out]


def init_params(key, nn_dims):
    """Deterministic init matching nn.Linear default (uniform(-1/sqrt(fan_in), +))."""
    params = []
    for i in range(len(nn_dims) - 1):
        d_in, d_out = nn_dims[i], nn_dims[i + 1]
        key, kw, kb = jax.random.split(key, 3)
        bound = 1.0 / jnp.sqrt(jnp.float32(d_in))
        # stored as (d_in, d_out) == transpose of PyTorch's (out, in) weight
        # TODO(synk): loading a real PyTorch state_dict requires w.T here.
        w = jax.random.uniform(kw, (d_in, d_out), jnp.float32, -bound, bound)
        b = jax.random.uniform(kb, (d_out,), jnp.float32, -bound, bound)
        params.append((w, b))
    return params


def reference_forward_bf16(x, params):
    """Plain-JAX reference with the same bf16 casting as the kernel."""
    n = len(params)
    x = x.astype(jnp.bfloat16)
    for i, (w, b) in enumerate(params):
        y = jnp.dot(x, w.astype(jnp.bfloat16),
                    preferred_element_type=jnp.float32) + b.astype(jnp.float32)
        if i < n - 1:
            x = jnp.maximum(y, 0.0).astype(jnp.bfloat16)
        else:
            x = y
    return x


def reference_forward_f32(x, params):
    """Full-f32 reference (loose sanity check of bf16 error)."""
    for w, b in params[:-1]:
        x = jnp.maximum(x @ w + b, 0.0)
    w, b = params[-1]
    return x @ w + b


if __name__ == "__main__":
    # nn_dims = [input, hidden..., output]; L = 2 hidden ReLU layers + final linear
    nn_dims = [16, 32, 32, 8]

    key = jax.random.PRNGKey(0)
    key, kp = jax.random.split(key)
    params = init_params(kp, nn_dims)

    # batch=8 exercises the single-block path; batch=300 exercises the
    # batch-parallel grid path (padded to 384 = 3 x 128-row tiles).
    for batch in (8, 300):
        key, kx = jax.random.split(key)
        x = jax.random.normal(kx, (batch, nn_dims[0]), jnp.float32)

        out = jax.block_until_ready(torch_nn_model_forward(x, params))
        assert out.shape == (batch, nn_dims[-1])

        ref_bf16 = reference_forward_bf16(x, params)
        assert jnp.allclose(out, ref_bf16, atol=5e-3, rtol=5e-3), \
            f"mismatch vs bf16-matched reference (batch={batch})"

        ref_f32 = reference_forward_f32(x, params)
        assert jnp.allclose(out, ref_f32, atol=1e-1, rtol=1e-1), \
            f"mismatch vs f32 reference (batch={batch})"

    print("KERNEL_OK")
</pallas_src>

<mosaic_0001>
module attributes {stable_mosaic.version = 11 : i64} {
  func.func @_mlp_kernel(%arg0: memref<8x16xbf16, #tpu.memory_space<vmem>>, %arg1: memref<16x32xbf16, #tpu.memory_space<vmem>>, %arg2: memref<1x32xf32, #tpu.memory_space<vmem>>, %arg3: memref<32x32xbf16, #tpu.memory_space<vmem>>, %arg4: memref<1x32xf32, #tpu.memory_space<vmem>>, %arg5: memref<32x128xbf16, #tpu.memory_space<vmem>>, %arg6: memref<1x128xf32, #tpu.memory_space<vmem>>, %arg7: memref<8x128xf32, #tpu.memory_space<vmem>>) attributes {dimension_semantics = [], scalar_prefetch = 0 : i64, scratch_operands = 0 : i64, tpu.core_type = #tpu.core_type<tc>} {
    %c0 = arith.constant 0 : index
    %c0_0 = arith.constant 0 : index
    %0 = vector.load %arg0[%c0, %c0_0] : memref<8x16xbf16, #tpu.memory_space<vmem>>, vector<8x16xbf16>
    %c0_1 = arith.constant 0 : index
    %c0_2 = arith.constant 0 : index
    %1 = vector.load %arg1[%c0_1, %c0_2] : memref<16x32xbf16, #tpu.memory_space<vmem>>, vector<16x32xbf16>
    %c0_3 = arith.constant 0 : index
    %c0_4 = arith.constant 0 : index
    %2 = vector.load %arg2[%c0_3, %c0_4] : memref<1x32xf32, #tpu.memory_space<vmem>>, vector<1x32xf32>
    %cst = arith.constant dense<0.000000e+00> : vector<8x32xf32>
    %3 = tpu.matmul %0, %1, %cst {dimension_numbers = #tpu.dot_dimension_numbers<[1], [0], [0], [1], [0, 0, 1, 1], [], []>} : vector<8x16xbf16>, vector<16x32xbf16>, vector<8x32xf32> -> vector<8x32xf32>
    %4 = vector.broadcast %2 : vector<1x32xf32> to vector<8x32xf32>
    %5 = arith.addf %3, %4 : vector<8x32xf32>
    %cst_5 = arith.constant 0.000000e+00 : f32
    %6 = vector.broadcast %cst_5 : f32 to vector<8x32xf32>
    %7 = arith.maximumf %5, %6 : vector<8x32xf32>
    %8 = arith.truncf %7 : vector<8x32xf32> to vector<8x32xbf16>
    %c0_6 = arith.constant 0 : index
    %c0_7 = arith.constant 0 : index
    %9 = vector.load %arg3[%c0_6, %c0_7] : memref<32x32xbf16, #tpu.memory_space<vmem>>, vector<32x32xbf16>
    %c0_8 = arith.constant 0 : index
    %c0_9 = arith.constant 0 : index
    %10 = vector.load %arg4[%c0_8, %c0_9] : memref<1x32xf32, #tpu.memory_space<vmem>>, vector<1x32xf32>
    %cst_10 = arith.constant dense<0.000000e+00> : vector<8x32xf32>
    %11 = tpu.matmul %8, %9, %cst_10 {dimension_numbers = #tpu.dot_dimension_numbers<[1], [0], [0], [1], [0, 0, 1, 1], [], []>} : vector<8x32xbf16>, vector<32x32xbf16>, vector<8x32xf32> -> vector<8x32xf32>
    %12 = vector.broadcast %10 : vector<1x32xf32> to vector<8x32xf32>
    %13 = arith.addf %11, %12 : vector<8x32xf32>
    %cst_11 = arith.constant 0.000000e+00 : f32
    %14 = vector.broadcast %cst_11 : f32 to vector<8x32xf32>
    %15 = arith.maximumf %13, %14 : vector<8x32xf32>
    %16 = arith.truncf %15 : vector<8x32xf32> to vector<8x32xbf16>
    %c0_12 = arith.constant 0 : index
    %c0_13 = arith.constant 0 : index
    %17 = vector.load %arg5[%c0_12, %c0_13] : memref<32x128xbf16, #tpu.memory_space<vmem>>, vector<32x128xbf16>
    %c0_14 = arith.constant 0 : index
    %c0_15 = arith.constant 0 : index
    %18 = vector.load %arg6[%c0_14, %c0_15] : memref<1x128xf32, #tpu.memory_space<vmem>>, vector<1x128xf32>
    %cst_16 = arith.constant dense<0.000000e+00> : vector<8x128xf32>
    %19 = tpu.matmul %16, %17, %cst_16 {dimension_numbers = #tpu.dot_dimension_numbers<[1], [0], [0], [1], [0, 0, 1, 1], [], []>} : vector<8x32xbf16>, vector<32x128xbf16>, vector<8x128xf32> -> vector<8x128xf32>
    %20 = vector.broadcast %18 : vector<1x128xf32> to vector<8x128xf32>
    %21 = arith.addf %19, %20 : vector<8x128xf32>
    %c0_17 = arith.constant 0 : index
    %c0_18 = arith.constant 0 : index
    %22 = vector.load %arg7[%c0_17, %c0_18] : memref<8x128xf32, #tpu.memory_space<vmem>>, vector<8x128xf32>
    tpu.vector_store %arg7[%c0_17, %c0_18], %21 {strides = array<i32>} : memref<8x128xf32, #tpu.memory_space<vmem>>, vector<8x128xf32>,
    return
  }
}

</mosaic_0001>

<llo_original>
// kernel: tpu_custom_call.1
$region0: #{tpu_custom_call.1}
  #allocation0 [shape = 'u32[]', space=smem, size = 0x4, offset = 0x4, fixed_abs, tag = 'smem constant byte address 0x4 - core index']
  #allocation1 [shape = 'u32[144,128]{1,0:T(1,128)}', space=vmem, size = 0x12000, scoped, tag = 'internal scratch']
  %s0 = inlined_call_operand.hbm [shape: bf16[8,16], index: 0, kind: input, shape index: {}]
  %s1 = inlined_call_operand.hbm [shape: bf16[16,32], index: 1, kind: input, shape index: {}]
  %s2 = inlined_call_operand.vmem [shape: f32[1,32], index: 2, kind: input, shape index: {}]
  %s3 = inlined_call_operand.hbm [shape: bf16[32,32], index: 3, kind: input, shape index: {}]
  %s4 = inlined_call_operand.vmem [shape: f32[1,32], index: 4, kind: input, shape index: {}]
  %s5 = inlined_call_operand.hbm [shape: bf16[32,128], index: 5, kind: input, shape index: {}]
  %s6 = inlined_call_operand.vmem [shape: f32[1,128], index: 6, kind: input, shape index: {}]
  %s7 = inlined_call_operand.hbm [shape: f32[8,128], index: 7, kind: output, shape index: {}]
  %s8 = sld [smem:[#allocation0]]
  $region54: #{tpu_custom_call.1} parent=0
    _
  %s10 = ssub.s32 1, %s8
  %s11 = scalar_select 0, %s10, %s8
  $region1: #{tpu_custom_call.1} parent=0
    #allocation2 [shape = 'u8[2048]{0}', space=vmem, size = 0x800, scoped, tag = 'input window, operand 0, single buffered']
    #allocation3 [shape = 's32[1]{0}', space=sflag, size = 0x4, scoped, tag = 'scoped memory for tpu_custom_call.1']
    #allocation4 [shape = 's32[1]{0}', space=sflag, size = 0x4, scoped, tag = 'scoped memory for tpu_custom_call.1']
    #allocation5 [shape = 'u8[4096]{0}', space=vmem, size = 0x1000, scoped, tag = 'input window, operand 1, single buffered']
    #allocation6 [shape = 's32[1]{0}', space=sflag, size = 0x4, scoped, tag = 'scoped memory for tpu_custom_call.1']
    #allocation7 [shape = 'u8[8192]{0}', space=vmem, size = 0x2000, scoped, tag = 'input window, operand 3, single buffered']
    #allocation8 [shape = 'u8[8192]{0}', space=vmem, size = 0x2000, scoped, tag = 'input window, operand 5, single buffered']
    #allocation9 [shape = 's32[1]{0}', space=sflag, size = 0x4, scoped, tag = 'scoped memory for tpu_custom_call.1']
    #allocation10 [shape = 'u8[4096]{0}', space=vmem, size = 0x1000, scoped, tag = 'output window, operand 0, single buffered']
    %12 = vsyncpa [#allocation3], 0
    %13 = vsyncpa [#allocation6], 0
    %14 = vsyncpa [#allocation9], 0
    %15 = vsyncpa [#allocation4], 0
    // Predicated region
    $region2: #{tpu_custom_call.1} parent=1 // pred_check
      _
    $region3: #{tpu_custom_call.1} parent=1 // pred_check_branch
      %17 = sbr.rel (0) target = $region5
    $region4: #{tpu_custom_call.1} parent=1 // pred_region
      %s19 = ssub.s32 64, 64
      %20 = vsyncadd [#allocation3], %s19
      %s22 = sshll.u32 [#allocation2], 4
      %s23 = int_to_ptr.vmem [resolvable:$true] %s22
      %25 = dma.hbm_to_vmem [thread:$0]  %s0, 64, %s23, [#allocation3]
    $region5: #{tpu_custom_call.1} parent=1 // pred_fallthru
      _
    // Predicated region
    $region6: #{tpu_custom_call.1} parent=1 // pred_check
      _
    $region7: #{tpu_custom_call.1} parent=1 // pred_check_branch
      %27 = sbr.rel (0) target = $region9
    $region8: #{tpu_custom_call.1} parent=1 // pred_region
      %s29 = ssub.s32 128, 128
      %30 = vsyncadd [#allocation6], %s29
      %s31 = sshll.u32 [#allocation5], 4
      %s32 = int_to_ptr.vmem [resolvable:$true] %s31
      %37 = dma.hbm_to_vmem [thread:$0]  %s1, 128, %s32, [#allocation6], 64, 64, 4
    $region9: #{tpu_custom_call.1} parent=1 // pred_fallthru
      _
    // Predicated region
    $region10: #{tpu_custom_call.1} parent=1 // pred_check
      _
    $region11: #{tpu_custom_call.1} parent=1 // pred_check_branch
      %39 = sbr.rel (0) target = $region13
    $region12: #{tpu_custom_call.1} parent=1 // pred_region
      _
    $region13: #{tpu_custom_call.1} parent=1 // pred_fallthru
      _
    // Predicated region
    $region14: #{tpu_custom_call.1} parent=1 // pred_check
      _
    $region15: #{tpu_custom_call.1} parent=1 // pred_check_branch
      %41 = sbr.rel (0) target = $region17
    $region16: #{tpu_custom_call.1} parent=1 // pred_region
      %s43 = ssub.s32 256, 256
      %44 = vsyncadd [#allocation6], %s43
      %s45 = sshll.u32 [#allocation7], 4
      %s46 = int_to_ptr.vmem [resolvable:$true] %s45
      %51 = dma.hbm_to_vmem [thread:$0]  %s3, 256, %s46, [#allocation6], 64, 64, 4
    $region17: #{tpu_custom_call.1} parent=1 // pred_fallthru
      _
    // Predicated region
    $region18: #{tpu_custom_call.1} parent=1 // pred_check
      _
    $region19: #{tpu_custom_call.1} parent=1 // pred_check_branch
      %53 = sbr.rel (0) target = $region21
    $region20: #{tpu_custom_call.1} parent=1 // pred_region
      _
    $region21: #{tpu_custom_call.1} parent=1 // pred_fallthru
      _
    // Predicated region
    $region22: #{tpu_custom_call.1} parent=1 // pred_check
      _
    $region23: #{tpu_custom_call.1} parent=1 // pred_check_branch
      %55 = sbr.rel (0) target = $region25
    $region24: #{tpu_custom_call.1} parent=1 // pred_region
      %s57 = ssub.s32 256, 256
      %58 = vsyncadd [#allocation9], %s57
      %s59 = sshll.u32 [#allocation8], 4
      %s60 = int_to_ptr.vmem [resolvable:$true] %s59
      %65 = dma.hbm_to_vmem [thread:$0]  %s5, 256, %s60, [#allocation9], 64, 64, 4
    $region25: #{tpu_custom_call.1} parent=1 // pred_fallthru
      _
    // Predicated region
    $region26: #{tpu_custom_call.1} parent=1 // pred_check
      _
    $region27: #{tpu_custom_call.1} parent=1 // pred_check_branch
      %67 = sbr.rel (0) target = $region29
    $region28: #{tpu_custom_call.1} parent=1 // pred_region
      _
    $region29: #{tpu_custom_call.1} parent=1 // pred_fallthru
      _
    // Predicated region
    $region30: #{tpu_custom_call.1} parent=1 // pred_check
      _
    $region31: #{tpu_custom_call.1} parent=1 // pred_check_branch
      %69 = sbr.rel (0) target = $region33
    $region32: #{tpu_custom_call.1} parent=1 // pred_region
      %70 = dma.done [#allocation3], 64
    $region33: #{tpu_custom_call.1} parent=1 // pred_fallthru
      _
    // Predicated region
    $region34: #{tpu_custom_call.1} parent=1 // pred_check
      _
    $region35: #{tpu_custom_call.1} parent=1 // pred_check_branch
      %72 = sbr.rel (0) target = $region37
    $region36: #{tpu_custom_call.1} parent=1 // pred_region
      %73 = dma.done [#allocation6], 128
    $region37: #{tpu_custom_call.1} parent=1 // pred_fallthru
      _
    // Predicated region
    $region38: #{tpu_custom_call.1} parent=1 // pred_check
      _
    $region39: #{tpu_custom_call.1} parent=1 // pred_check_branch
      %75 = sbr.rel (0) target = $region41
    $region40: #{tpu_custom_call.1} parent=1 // pred_region
      %76 = dma.done [#allocation6], 256
    $region41: #{tpu_custom_call.1} parent=1 // pred_fallthru
      _
    // Predicated region
    $region42: #{tpu_custom_call.1} parent=1 // pred_check
      _
    $region43: #{tpu_custom_call.1} parent=1 // pred_check_branch
      %78 = sbr.rel (0) target = $region45
    $region44: #{tpu_custom_call.1} parent=1 // pred_region
      %79 = dma.done [#allocation9], 256
    $region45: #{tpu_custom_call.1} parent=1 // pred_fallthru
      _
    %v81 = vld [vmem:[#allocation2] sm:$0xf]
    %v82 = vld [vmem:[#allocation5] sm:$0xf]
    %v83 = vld [vmem:[#allocation5 + $0x4] sm:$0xf]
    %v84 = vld [vmem:[%s2] sm:$0x1]
    %v86 = vlaneseq
    %v87 = vshrl.u32 %v86, 7
    %v88 = vsub.s32 0, %v87
    %v89 = vrot.slane %v84, %v88
    %v93 = vunpack.c.l.b16 %v82
    %v94 = vunpack.c.l.b16 %v83
    %v95 = vpack.c.b16 %v94, %v93
    %vm97 = vcmask 130048
    %v99 = vsel %vm97, %v81, 0
    %101 = vmatprep.subr.bf16.mxu0 0
    %102 = vmatpush1.bf16.msra.mxu0 0
    %103 = vmatprep.subr.bf16.mxu0 0
    %104 = vmatpush1.bf16.msra.mxu0 0
    %105 = vmatprep.subr.bf16.mxu0 0
    %106 = vmatpush1.bf16.msra.mxu0 0
    %107 = vmatprep.subr.bf16.mxu0 0
    %108 = vmatpush1.bf16.msra.mxu0 0
    %109 = vmatprep.subr.bf16.mxu0 0
    %110 = vmatpush1.bf16.msra.mxu0 0
    %111 = vmatprep.subr.bf16.mxu0 0
    %112 = vmatpush1.bf16.msra.mxu0 0
    %113 = vmatprep.subr.bf16.mxu0 0
    %114 = vmatpush1.bf16.msra.mxu0 0
    %115 = vmatprep.subr.bf16.mxu0 0
    %116 = vmatpush1.bf16.msra.mxu0 %v95
    %117 = vmatprep.subr.bf16.mxu0 0
    %118 = vmatpush2.bf16.msra.mxu0 0
    %119 = vmatprep.subr.bf16.mxu0 0
    %120 = vmatpush2.bf16.msra.mxu0 0
    %121 = vmatprep.subr.bf16.mxu0 0
    %122 = vmatpush2.bf16.msra.mxu0 0
    %123 = vmatprep.subr.bf16.mxu0 0
    %124 = vmatpush2.bf16.msra.mxu0 0
    %125 = vmatprep.subr.bf16.mxu0 0
    %126 = vmatpush2.bf16.msra.mxu0 0
    %127 = vmatprep.subr.bf16.mxu0 0
    %128 = vmatpush2.bf16.msra.mxu0 0
    %129 = vmatprep.subr.bf16.mxu0 0
    %130 = vmatpush2.bf16.msra.mxu0 0
    %131 = vmatprep.subr.bf16.mxu0 0
    %132 = vmatpush2.bf16.msra.mxu0 0
    %133 = vmatprep.mubr.bf16.mxu0 0
    %134 = vmatmul.mubr.bf16.gmra.mxu0 %v99
    %v135 = vpop.f32.mrf.mxu0
    %v136 = vadd.f32 %v89, %v135
    %v137 = vpop.f32.mrf.mxu0
    %v138 = vpop.f32.mrf.mxu0
    %v139 = vpop.f32.mrf.mxu0
    %140 = vdwg.mxu0
    %v141 = vmax.f32 %v136, 0.0
    %v142 = vpack.c.bf16 %v141, %v141
    %v143 = vld [vmem:[#allocation7] sm:$0xf]
    %v144 = vld [vmem:[#allocation7 + $0x4] sm:$0xf]
    %v145 = vld [vmem:[#allocation7 + $0x8] sm:$0xf]
    %v146 = vld [vmem:[#allocation7 + $0xc] sm:$0xf]
    %v147 = vld [vmem:[%s4] sm:$0x1]
    %v149 = vlaneseq
    %v150 = vshrl.u32 %v149, 7
    %v151 = vsub.s32 0, %v150
    %v152 = vrot.slane %v147, %v151
    %v158 = vunpack.c.l.b16 %v143
    %v159 = vunpack.c.l.b16 %v144
    %v160 = vunpack.c.l.b16 %v145
    %v161 = vunpack.c.l.b16 %v146
    %v162 = vpack.c.b16 %v159, %v158
    %v163 = vpack.c.b16 %v161, %v160
    %vm166 = vcmask 261120
    %v168 = vsel %vm166, %v142, 0
    %170 = vmatprep.subr.bf16.mxu0 0
    %171 = vmatpush1.bf16.msra.mxu0 0
    %172 = vmatprep.subr.bf16.mxu0 0
    %173 = vmatpush1.bf16.msra.mxu0 0
    %174 = vmatprep.subr.bf16.mxu0 0
    %175 = vmatpush1.bf16.msra.mxu0 0
    %176 = vmatprep.subr.bf16.mxu0 0
    %177 = vmatpush1.bf16.msra.mxu0 0
    %178 = vmatprep.subr.bf16.mxu0 0
    %179 = vmatpush1.bf16.msra.mxu0 0
    %180 = vmatprep.subr.bf16.mxu0 0
    %181 = vmatpush1.bf16.msra.mxu0 0
    %182 = vmatprep.subr.bf16.mxu0 0
    %183 = vmatpush1.bf16.msra.mxu0 %v163
    %184 = vmatprep.subr.bf16.mxu0 0
    %185 = vmatpush1.bf16.msra.mxu0 %v162
    %186 = vmatprep.subr.bf16.mxu0 0
    %187 = vmatpush2.bf16.msra.mxu0 0
    %188 = vmatprep.subr.bf16.mxu0 0
    %189 = vmatpush2.bf16.msra.mxu0 0
    %190 = vmatprep.subr.bf16.mxu0 0
    %191 = vmatpush2.bf16.msra.mxu0 0
    %192 = vmatprep.subr.bf16.mxu0 0
    %193 = vmatpush2.bf16.msra.mxu0 0
    %194 = vmatprep.subr.bf16.mxu0 0
    %195 = vmatpush2.bf16.msra.mxu0 0
    %196 = vmatprep.subr.bf16.mxu0 0
    %197 = vmatpush2.bf16.msra.mxu0 0
    %198 = vmatprep.subr.bf16.mxu0 0
    %199 = vmatpush2.bf16.msra.mxu0 0
    %200 = vmatprep.subr.bf16.mxu0 0
    %201 = vmatpush2.bf16.msra.mxu0 0
    %202 = vmatprep.mubr.bf16.mxu0 0
    %203 = vmatmul.mubr.bf16.gmra.mxu0 %v168
    %v204 = vpop.f32.mrf.mxu0
    %v205 = vadd.f32 %v152, %v204
    %v206 = vpop.f32.mrf.mxu0
    %v207 = vpop.f32.mrf.mxu0
    %v208 = vpop.f32.mrf.mxu0
    %209 = vdwg.mxu0
    %v210 = vmax.f32 %v205, 0.0
    %v211 = vpack.c.bf16 %v210, %v210
    %v212 = vld [vmem:[#allocation8] sm:$0xf]
    %v213 = vld [vmem:[#allocation8 + $0x4] sm:$0xf]
    %v214 = vld [vmem:[#allocation8 + $0x8] sm:$0xf]
    %v215 = vld [vmem:[#allocation8 + $0xc] sm:$0xf]
    %v216 = vld [vmem:[%s6] sm:$0x1]
    %v218 = vlaneseq
    %v219 = vshrl.u32 %v218, 7
    %v220 = vsub.s32 0, %v219
    %v221 = vrot.slane %v216, %v220
    %v227 = vunpack.c.l.b16 %v212
    %v228 = vunpack.c.l.b16 %v213
    %v229 = vunpack.c.l.b16 %v214
    %v230 = vunpack.c.l.b16 %v215
    %v231 = vpack.c.b16 %v228, %v227
    %v232 = vpack.c.b16 %v230, %v229
    %v236 = vsel %vm166, %v211, 0
    %238 = vmatprep.subr.bf16.mxu0 0
    %239 = vmatpush1.bf16.msra.mxu0 0
    %240 = vmatprep.subr.bf16.mxu0 0
    %241 = vmatpush1.bf16.msra.mxu0 0
    %242 = vmatprep.subr.bf16.mxu0 0
    %243 = vmatpush1.bf16.msra.mxu0 0
    %244 = vmatprep.subr.bf16.mxu0 0
    %245 = vmatpush1.bf16.msra.mxu0 0
    %246 = vmatprep.subr.bf16.mxu0 0
    %247 = vmatpush1.bf16.msra.mxu0 0
    %248 = vmatprep.subr.bf16.mxu0 0
    %249 = vmatpush1.bf16.msra.mxu0 0
    %250 = vmatprep.subr.bf16.mxu0 0
    %251 = vmatpush1.bf16.msra.mxu0 %v232
    %252 = vmatprep.subr.bf16.mxu0 0
    %253 = vmatpush1.bf16.msra.mxu0 %v231
    %254 = vmatprep.subr.bf16.mxu0 0
    %255 = vmatpush2.bf16.msra.mxu0 0
    %256 = vmatprep.subr.bf16.mxu0 0
    %257 = vmatpush2.bf16.msra.mxu0 0
    %258 = vmatprep.subr.bf16.mxu0 0
    %259 = vmatpush2.bf16.msra.mxu0 0
    %260 = vmatprep.subr.bf16.mxu0 0
    %261 = vmatpush2.bf16.msra.mxu0 0
    %262 = vmatprep.subr.bf16.mxu0 0
    %263 = vmatpush2.bf16.msra.mxu0 0
    %264 = vmatprep.subr.bf16.mxu0 0
    %265 = vmatpush2.bf16.msra.mxu0 0
    %266 = vmatprep.subr.bf16.mxu0 0
    %267 = vmatpush2.bf16.msra.mxu0 0
    %268 = vmatprep.subr.bf16.mxu0 0
    %269 = vmatpush2.bf16.msra.mxu0 0
    %270 = vmatprep.mubr.bf16.mxu0 0
    %271 = vmatmul.mubr.bf16.gmra.mxu0 %v236
    %v272 = vpop.f32.mrf.mxu0
    %v273 = vadd.f32 %v221, %v272
    %v274 = vpop.f32.mrf.mxu0
    %v275 = vpop.f32.mrf.mxu0
    %v276 = vpop.f32.mrf.mxu0
    %277 = vdwg.mxu0
    %278 = vst [vmem:[#allocation10] sm:$0xff] %v273
    // Predicated region
    $region46: #{tpu_custom_call.1} parent=1 // pred_check
      _
    $region47: #{tpu_custom_call.1} parent=1 // pred_check_branch
      %280 = sbr.rel (0) target = $region49
    $region48: #{tpu_custom_call.1} parent=1 // pred_region
      %s282 = ssub.s32 128, 128
      %283 = vsyncadd [#allocation4], %s282
      %s285 = sshll.u32 [#allocation10], 4
      %s286 = int_to_ptr.vmem [resolvable:$true] %s285
      %288 = dma.vmem_to_hbm [thread:$0]  %s286, 128, %s7, [#allocation4]
    $region49: #{tpu_custom_call.1} parent=1 // pred_fallthru
      _
    // Predicated region
    $region50: #{tpu_custom_call.1} parent=1 // pred_check
      _
    $region51: #{tpu_custom_call.1} parent=1 // pred_check_branch
      %290 = sbr.rel (0) target = $region53
    $region52: #{tpu_custom_call.1} parent=1 // pred_region
      %291 = dma.done [#allocation4], 128
    $region53: #{tpu_custom_call.1} parent=1 // pred_fallthru
      _
    %292 = vsyncpa [#allocation3], 1
    %293 = vsyncpa [#allocation6], 1
    %294 = vsyncpa [#allocation9], 1
    %295 = vsyncpa [#allocation4], 1

</llo_original>
